<compile_context>
chip_gen: v5e
topology: v5e:2x2
jax: 0.10.0
libtpu: 0.0.40
codegen_flags: <defaults>
</compile_context>

<pallas_src>
import jax
import jax.numpy as jnp
import numpy as np
from jax.experimental import pallas as pl
from jax.experimental.pallas import tpu as pltpu


# ----------------------------- Pallas kernels ------------------------------

def pool_sums_kernel(bev_ref, sem_ref, com_ref, sb_ref, ss_ref, sc_ref):
    """Accumulate per-channel spatial sums for the three inputs.

    bev_ref: (1, T, C); sem_ref/com_ref: (1, T, Ch)
    sb_ref:  (1, 1, C); ss_ref/sc_ref:   (1, 1, Ch)
    The output blocks stay resident across the row-tile grid axis
    (accumulator pattern, init on the first tile).
    """
    @pl.when(pl.program_id(1) == 0)
    def _():
        sb_ref[...] = jnp.zeros_like(sb_ref)
        ss_ref[...] = jnp.zeros_like(ss_ref)
        sc_ref[...] = jnp.zeros_like(sc_ref)

    # (1, C) += sum over the T rows of this tile.  Ranks kept 2-D throughout.
    sb_ref[0] = sb_ref[0] + jnp.sum(bev_ref[0], axis=0, keepdims=True)
    ss_ref[0] = ss_ref[0] + jnp.sum(sem_ref[0], axis=0, keepdims=True)
    sc_ref[0] = sc_ref[0] + jnp.sum(com_ref[0], axis=0, keepdims=True)


def fusion_kernel(bev_ref, sem_ref, com_ref,
                  ws_ref, bs_ref, wc_ref, bc_ref,
                  ab_ref, as_ref, ac_ref, o_ref):
    """Fused: 1x1 adapters (single MXU matmul each) + channel gates + sum.

    bev_ref: (1, T, C); sem_ref/com_ref: (1, T, Ch)
    ws_ref/wc_ref: (Ch, C); bs_ref/bc_ref: (1, C)
    ab_ref/as_ref/ac_ref: (1, 1, C) per-batch sigmoid gates
    o_ref: (1, T, C)
    """
    bev = bev_ref[0]                                            # (T, C)
    sem_a = jnp.dot(sem_ref[0], ws_ref[...],
                    preferred_element_type=jnp.float32) + bs_ref[...]   # (T, C)
    com_a = jnp.dot(com_ref[0], wc_ref[...],
                    preferred_element_type=jnp.float32) + bc_ref[...]   # (T, C)
    fused = bev * ab_ref[0] + sem_a * as_ref[0] + com_a * ac_ref[0]     # (T, C)
    o_ref[0] = fused.astype(o_ref.dtype)


# ------------------------------ Pallas wrappers -----------------------------

def _pick_row_tile(hw, max_rows):
    """Largest multiple-of-8 divisor of hw that is <= max_rows (else hw)."""
    best = None
    t = 8
    while t <= min(hw, max_rows):
        if hw % t == 0:
            best = t
        t += 8
    return best if best is not None else hw


def _channel_sums(bev, sem, com, tile):
    """One fused pass: per-batch channel sums of bev/sem/com."""
    N, HW, C = bev.shape
    Ch = sem.shape[-1]
    n_tiles = HW // tile
    return pl.pallas_call(
        pool_sums_kernel,
        out_shape=(
            jax.ShapeDtypeStruct((N, 1, C), jnp.float32),
            jax.ShapeDtypeStruct((N, 1, Ch), jnp.float32),
            jax.ShapeDtypeStruct((N, 1, Ch), jnp.float32),
        ),
        grid_spec=pltpu.PrefetchScalarGridSpec(
            num_scalar_prefetch=0,
            grid=(N, n_tiles),
            in_specs=[
                pl.BlockSpec((1, tile, C), lambda n, t: (n, t, 0)),
                pl.BlockSpec((1, tile, Ch), lambda n, t: (n, t, 0)),
                pl.BlockSpec((1, tile, Ch), lambda n, t: (n, t, 0)),
            ],
            out_specs=[
                pl.BlockSpec((1, 1, C), lambda n, t: (n, 0, 0)),
                pl.BlockSpec((1, 1, Ch), lambda n, t: (n, 0, 0)),
                pl.BlockSpec((1, 1, Ch), lambda n, t: (n, 0, 0)),
            ],
        ),
        compiler_params=pltpu.CompilerParams(
            dimension_semantics=("parallel", "arbitrary")),
    )(bev, sem, com)


def _fused_gate_sum(bev, sem, com, w_s, b_s, w_c, b_c, a_b, a_s, a_c, tile):
    """One fused pass: adapter matmuls + gating + 3-way sum -> output."""
    N, HW, C = bev.shape
    Ch = sem.shape[-1]
    n_tiles = HW // tile
    return pl.pallas_call(
        fusion_kernel,
        out_shape=jax.ShapeDtypeStruct((N, HW, C), jnp.float32),
        grid_spec=pltpu.PrefetchScalarGridSpec(
            num_scalar_prefetch=0,
            grid=(N, n_tiles),
            in_specs=[
                pl.BlockSpec((1, tile, C), lambda n, t: (n, t, 0)),
                pl.BlockSpec((1, tile, Ch), lambda n, t: (n, t, 0)),
                pl.BlockSpec((1, tile, Ch), lambda n, t: (n, t, 0)),
                pl.BlockSpec((Ch, C), lambda n, t: (0, 0)),
                pl.BlockSpec((1, C), lambda n, t: (0, 0)),
                pl.BlockSpec((Ch, C), lambda n, t: (0, 0)),
                pl.BlockSpec((1, C), lambda n, t: (0, 0)),
                pl.BlockSpec((1, 1, C), lambda n, t: (n, 0, 0)),
                pl.BlockSpec((1, 1, C), lambda n, t: (n, 0, 0)),
                pl.BlockSpec((1, 1, C), lambda n, t: (n, 0, 0)),
            ],
            out_specs=pl.BlockSpec((1, tile, C), lambda n, t: (n, t, 0)),
        ),
        compiler_params=pltpu.CompilerParams(
            dimension_semantics=("parallel", "parallel")),
    )(bev, sem, com, w_s, b_s, w_c, b_c, a_b, a_s, a_c)


# ------------------------------- forward pass -------------------------------

def bev_fusion_v1_forward(bev_nchw, sem_nchw, com_nchw, params,
                          *, max_tile_rows=1024):
    """params = (w_adp_sem, b_adp_sem, w_adp_com, b_adp_com,
                 w_att_bev, b_att_bev, w_att_sem, b_att_sem,
                 w_att_com, b_att_com), weights in (Cin, Cout) layout."""
    (w_adp_sem, b_adp_sem, w_adp_com, b_adp_com,
     w_att_bev, b_att_bev, w_att_sem, b_att_sem,
     w_att_com, b_att_com) = params

    N, C, H, W = bev_nchw.shape
    Ch = sem_nchw.shape[1]
    HW = H * W

    # NCHW -> (N, H*W, C): channels lane-dense, rows on the sublane axis.
    bev = jnp.transpose(bev_nchw, (0, 2, 3, 1)).reshape(N, HW, C)
    sem = jnp.transpose(sem_nchw, (0, 2, 3, 1)).reshape(N, HW, Ch)
    com = jnp.transpose(com_nchw, (0, 2, 3, 1)).reshape(N, HW, Ch)

    tile = _pick_row_tile(HW, max_tile_rows)

    # ---- Pass 1 (Pallas): fused channel sums of all three inputs ----------
    sum_bev, sum_sem, sum_com = _channel_sums(bev, sem, com, tile)
    inv_hw = jnp.float32(1.0 / HW)
    pooled_bev = sum_bev[:, 0, :] * inv_hw                        # (N, C)
    # The 1x1 adapter commutes with global average pooling.
    pooled_sem = (sum_sem[:, 0, :] * inv_hw) @ w_adp_sem + b_adp_sem
    pooled_com = (sum_com[:, 0, :] * inv_hw) @ w_adp_com + b_adp_com

    # Tiny (N, C)-sized gate 1x1 convs + sigmoid: negligible, plain JAX glue.
    attn_bev = jax.nn.sigmoid(pooled_bev @ w_att_bev + b_att_bev)  # (N, C)
    attn_sem = jax.nn.sigmoid(pooled_sem @ w_att_sem + b_att_sem)
    attn_com = jax.nn.sigmoid(pooled_com @ w_att_com + b_att_com)

    # ---- Pass 2 (Pallas): adapter matmul + gating + sum, one write --------
    out = _fused_gate_sum(
        bev, sem, com,
        w_adp_sem, b_adp_sem.reshape(1, C),
        w_adp_com, b_adp_com.reshape(1, C),
        attn_bev.reshape(N, 1, C),
        attn_sem.reshape(N, 1, C),
        attn_com.reshape(N, 1, C),
        tile)

    return jnp.transpose(out.reshape(N, H, W, C), (0, 3, 1, 2))    # -> NCHW


# ------------------------- pure-JAX reference (NCHW) -------------------------

def reference_forward(bev, sem, com, params):
    (w_adp_sem, b_adp_sem, w_adp_com, b_adp_com,
     w_att_bev, b_att_bev, w_att_sem, b_att_sem,
     w_att_com, b_att_com) = params

    def conv1x1(x, w_io, b):
        return jnp.einsum("nihw,io->nohw", x, w_io) + b.reshape(1, -1, 1, 1)

    def attention(x, w_io, b):
        pooled = jnp.mean(x, axis=(2, 3))                 # AdaptiveAvgPool2d(1)
        gate = jax.nn.sigmoid(pooled @ w_io + b)          # Conv2d(C,C,1)+Sigmoid
        return gate[:, :, None, None]

    sem_a = conv1x1(sem, w_adp_sem, b_adp_sem)
    com_a = conv1x1(com, w_adp_com, b_adp_com)
    return (bev * attention(bev, w_att_bev, b_att_bev)
            + sem_a * attention(sem_a, w_att_sem, b_att_sem)
            + com_a * attention(com_a, w_att_com, b_att_com))


# ----------------------------------- main ------------------------------------

if __name__ == "__main__":
    N, C, H, W = 2, 16, 16, 16
    Ch = C // 2

    key = jax.random.PRNGKey(0)
    ks = jax.random.split(key, 13)

    # 1x1 conv params, weights in (Cin, Cout) layout.
    w_adp_sem = 0.2 * jax.random.normal(ks[0], (Ch, C), jnp.float32)
    b_adp_sem = 0.1 * jax.random.normal(ks[1], (C,), jnp.float32)
    w_adp_com = 0.2 * jax.random.normal(ks[2], (Ch, C), jnp.float32)
    b_adp_com = 0.1 * jax.random.normal(ks[3], (C,), jnp.float32)
    w_att_bev = 0.2 * jax.random.normal(ks[4], (C, C), jnp.float32)
    b_att_bev = 0.1 * jax.random.normal(ks[5], (C,), jnp.float32)
    w_att_sem = 0.2 * jax.random.normal(ks[6], (C, C), jnp.float32)
    b_att_sem = 0.1 * jax.random.normal(ks[7], (C,), jnp.float32)
    w_att_com = 0.2 * jax.random.normal(ks[8], (C, C), jnp.float32)
    b_att_com = 0.1 * jax.random.normal(ks[9], (C,), jnp.float32)

    params = (w_adp_sem, b_adp_sem, w_adp_com, b_adp_com,
              w_att_bev, b_att_bev, w_att_sem, b_att_sem,
              w_att_com, b_att_com)

    bev = jax.random.normal(ks[10], (N, C, H, W), jnp.float32)
    sem = jax.random.normal(ks[11], (N, Ch, H, W), jnp.float32)
    com = jax.random.normal(ks[12], (N, Ch, H, W), jnp.float32)

    # max_tile_rows=64 -> 4 row tiles per batch image: exercises the
    # accumulator pattern and gives the pipeline several grid steps.
    out = bev_fusion_v1_forward(bev, sem, com, params, max_tile_rows=64)
    out = jax.block_until_ready(out)

    ref = jax.block_until_ready(reference_forward(bev, sem, com, params))
    np.testing.assert_allclose(np.asarray(out), np.asarray(ref),
                               rtol=1e-4, atol=1e-4)

    print("KERNEL_OK")
</pallas_src>

<mosaic_0001>
module attributes {stable_mosaic.version = 11 : i64} {
  func.func @pool_sums_kernel(%arg0: i32, %arg1: i32, %arg2: memref<1x64x16xf32, #tpu.memory_space<vmem>>, %arg3: memref<1x64x8xf32, #tpu.memory_space<vmem>>, %arg4: memref<1x64x8xf32, #tpu.memory_space<vmem>>, %arg5: memref<1x1x16xf32, #tpu.memory_space<vmem>>, %arg6: memref<1x1x8xf32, #tpu.memory_space<vmem>>, %arg7: memref<1x1x8xf32, #tpu.memory_space<vmem>>) attributes {dimension_semantics = [#tpu.dimension_semantics<parallel>, #tpu.dimension_semantics<arbitrary>], iteration_bounds = array<i64: 2, 4>, scalar_prefetch = 0 : i64, scratch_operands = 0 : i64, tpu.core_type = #tpu.core_type<tc>, window_params = [{transform_indices = @transform_0, window_bounds = array<i64: 1, 64, 16>}, {transform_indices = @transform_1, window_bounds = array<i64: 1, 64, 8>}, {transform_indices = @transform_2, window_bounds = array<i64: 1, 64, 8>}, {transform_indices = @transform_3, window_bounds = array<i64: 1, 1, 16>}, {transform_indices = @transform_4, window_bounds = array<i64: 1, 1, 8>}, {transform_indices = @transform_5, window_bounds = array<i64: 1, 1, 8>}]} {
    %c0_i32 = arith.constant 0 : i32
    %0 = arith.cmpi eq, %arg1, %c0_i32 : i32
    %1 = arith.extui %0 : i1 to i32
    %c0_i32_0 = arith.constant 0 : i32
    %2 = arith.cmpi ne, %1, %c0_i32_0 : i32
    scf.if %2 {
      %cst_29 = arith.constant 0.000000e+00 : f32
      %33 = vector.broadcast %cst_29 : f32 to vector<1x1x16xf32>
      %c0_30 = arith.constant 0 : index
      %c0_31 = arith.constant 0 : index
      %c0_32 = arith.constant 0 : index
      %34 = vector.load %arg5[%c0_30, %c0_31, %c0_32] : memref<1x1x16xf32, #tpu.memory_space<vmem>>, vector<1x1x16xf32>
      tpu.vector_store %arg5[%c0_30, %c0_31, %c0_32], %33 {strides = array<i32>} : memref<1x1x16xf32, #tpu.memory_space<vmem>>, vector<1x1x16xf32>,
      %cst_33 = arith.constant 0.000000e+00 : f32
      %35 = vector.broadcast %cst_33 : f32 to vector<1x1x8xf32>
      %c0_34 = arith.constant 0 : index
      %c0_35 = arith.constant 0 : index
      %c0_36 = arith.constant 0 : index
      %36 = vector.load %arg6[%c0_34, %c0_35, %c0_36] : memref<1x1x8xf32, #tpu.memory_space<vmem>>, vector<1x1x8xf32>
      tpu.vector_store %arg6[%c0_34, %c0_35, %c0_36], %35 {strides = array<i32>} : memref<1x1x8xf32, #tpu.memory_space<vmem>>, vector<1x1x8xf32>,
      %cst_37 = arith.constant 0.000000e+00 : f32
      %37 = vector.broadcast %cst_37 : f32 to vector<1x1x8xf32>
      %c0_38 = arith.constant 0 : index
      %c0_39 = arith.constant 0 : index
      %c0_40 = arith.constant 0 : index
      %38 = vector.load %arg7[%c0_38, %c0_39, %c0_40] : memref<1x1x8xf32, #tpu.memory_space<vmem>>, vector<1x1x8xf32>
      tpu.vector_store %arg7[%c0_38, %c0_39, %c0_40], %37 {strides = array<i32>} : memref<1x1x8xf32, #tpu.memory_space<vmem>>, vector<1x1x8xf32>,
    } else {
    }
    %c0 = arith.constant 0 : index
    %c0_1 = arith.constant 0 : index
    %c0_2 = arith.constant 0 : index
    %3 = vector.load %arg5[%c0, %c0_1, %c0_2] : memref<1x1x16xf32, #tpu.memory_space<vmem>>, vector<1x1x16xf32>
    %4 = vector.shape_cast %3 : vector<1x1x16xf32> to vector<1x16xf32>
    %c0_3 = arith.constant 0 : index
    %c0_4 = arith.constant 0 : index
    %c0_5 = arith.constant 0 : index
    %5 = vector.load %arg2[%c0_3, %c0_4, %c0_5] : memref<1x64x16xf32, #tpu.memory_space<vmem>>, vector<1x64x16xf32>
    %6 = vector.shape_cast %5 : vector<1x64x16xf32> to vector<64x16xf32>
    %cst = arith.constant dense<0.000000e+00> : vector<16xf32>
    %7 = vector.multi_reduction <add>, %6, %cst [0] : vector<64x16xf32> to vector<16xf32>
    %8 = vector.shape_cast %7 : vector<16xf32> to vector<1x16xf32>
    %9 = arith.addf %4, %8 : vector<1x16xf32>
    %c0_6 = arith.constant 0 : index
    %c0_7 = arith.constant 0 : index
    %c0_8 = arith.constant 0 : index
    %10 = vector.load %arg5[%c0_6, %c0_7, %c0_8] : memref<1x1x16xf32, #tpu.memory_space<vmem>>, vector<1x1x16xf32>
    %11 = vector.shape_cast %10 : vector<1x1x16xf32> to vector<1x16xf32>
    %12 = vector.shape_cast %9 : vector<1x16xf32> to vector<1x1x16xf32>
    tpu.vector_store %arg5[%c0_6, %c0_7, %c0_8], %12 {strides = array<i32>} : memref<1x1x16xf32, #tpu.memory_space<vmem>>, vector<1x1x16xf32>,
    %c0_9 = arith.constant 0 : index
    %c0_10 = arith.constant 0 : index
    %c0_11 = arith.constant 0 : index
    %13 = vector.load %arg6[%c0_9, %c0_10, %c0_11] : memref<1x1x8xf32, #tpu.memory_space<vmem>>, vector<1x1x8xf32>
    %14 = vector.shape_cast %13 : vector<1x1x8xf32> to vector<1x8xf32>
    %c0_12 = arith.constant 0 : index
    %c0_13 = arith.constant 0 : index
    %c0_14 = arith.constant 0 : index
    %15 = vector.load %arg3[%c0_12, %c0_13, %c0_14] : memref<1x64x8xf32, #tpu.memory_space<vmem>>, vector<1x64x8xf32>
    %16 = vector.shape_cast %15 : vector<1x64x8xf32> to vector<64x8xf32>
    %cst_15 = arith.constant dense<0.000000e+00> : vector<8xf32>
    %17 = vector.multi_reduction <add>, %16, %cst_15 [0] : vector<64x8xf32> to vector<8xf32>
    %18 = vector.shape_cast %17 : vector<8xf32> to vector<1x8xf32>
    %19 = arith.addf %14, %18 : vector<1x8xf32>
    %c0_16 = arith.constant 0 : index
    %c0_17 = arith.constant 0 : index
    %c0_18 = arith.constant 0 : index
    %20 = vector.load %arg6[%c0_16, %c0_17, %c0_18] : memref<1x1x8xf32, #tpu.memory_space<vmem>>, vector<1x1x8xf32>
    %21 = vector.shape_cast %20 : vector<1x1x8xf32> to vector<1x8xf32>
    %22 = vector.shape_cast %19 : vector<1x8xf32> to vector<1x1x8xf32>
    tpu.vector_store %arg6[%c0_16, %c0_17, %c0_18], %22 {strides = array<i32>} : memref<1x1x8xf32, #tpu.memory_space<vmem>>, vector<1x1x8xf32>,
    %c0_19 = arith.constant 0 : index
    %c0_20 = arith.constant 0 : index
    %c0_21 = arith.constant 0 : index
    %23 = vector.load %arg7[%c0_19, %c0_20, %c0_21] : memref<1x1x8xf32, #tpu.memory_space<vmem>>, vector<1x1x8xf32>
    %24 = vector.shape_cast %23 : vector<1x1x8xf32> to vector<1x8xf32>
    %c0_22 = arith.constant 0 : index
    %c0_23 = arith.constant 0 : index
    %c0_24 = arith.constant 0 : index
    %25 = vector.load %arg4[%c0_22, %c0_23, %c0_24] : memref<1x64x8xf32, #tpu.memory_space<vmem>>, vector<1x64x8xf32>
    %26 = vector.shape_cast %25 : vector<1x64x8xf32> to vector<64x8xf32>
    %cst_25 = arith.constant dense<0.000000e+00> : vector<8xf32>
    %27 = vector.multi_reduction <add>, %26, %cst_25 [0] : vector<64x8xf32> to vector<8xf32>
    %28 = vector.shape_cast %27 : vector<8xf32> to vector<1x8xf32>
    %29 = arith.addf %24, %28 : vector<1x8xf32>
    %c0_26 = arith.constant 0 : index
    %c0_27 = arith.constant 0 : index
    %c0_28 = arith.constant 0 : index
    %30 = vector.load %arg7[%c0_26, %c0_27, %c0_28] : memref<1x1x8xf32, #tpu.memory_space<vmem>>, vector<1x1x8xf32>
    %31 = vector.shape_cast %30 : vector<1x1x8xf32> to vector<1x8xf32>
    %32 = vector.shape_cast %29 : vector<1x8xf32> to vector<1x1x8xf32>
    tpu.vector_store %arg7[%c0_26, %c0_27, %c0_28], %32 {strides = array<i32>} : memref<1x1x8xf32, #tpu.memory_space<vmem>>, vector<1x1x8xf32>,
    return
  }
  func.func @transform_0(%arg0: i32, %arg1: i32) -> (i32, i32, i32) {
    %c0_i32 = arith.constant 0 : i32
    %c0_i32_0 = arith.constant 0 : i32
    return %arg0, %arg1, %c0_i32 : i32, i32, i32
  }
  func.func @transform_1(%arg0: i32, %arg1: i32) -> (i32, i32, i32) {
    %c0_i32 = arith.constant 0 : i32
    %c0_i32_0 = arith.constant 0 : i32
    return %arg0, %arg1, %c0_i32 : i32, i32, i32
  }
  func.func @transform_2(%arg0: i32, %arg1: i32) -> (i32, i32, i32) {
    %c0_i32 = arith.constant 0 : i32
    %c0_i32_0 = arith.constant 0 : i32
    return %arg0, %arg1, %c0_i32 : i32, i32, i32
  }
  func.func @transform_3(%arg0: i32, %arg1: i32) -> (i32, i32, i32) {
    %c0_i32 = arith.constant 0 : i32
    %c0_i32_0 = arith.constant 0 : i32
    %c0_i32_1 = arith.constant 0 : i32
    return %arg0, %c0_i32, %c0_i32_0 : i32, i32, i32
  }
  func.func @transform_4(%arg0: i32, %arg1: i32) -> (i32, i32, i32) {
    %c0_i32 = arith.constant 0 : i32
    %c0_i32_0 = arith.constant 0 : i32
    %c0_i32_1 = arith.constant 0 : i32
    return %arg0, %c0_i32, %c0_i32_0 : i32, i32, i32
  }
  func.func @transform_5(%arg0: i32, %arg1: i32) -> (i32, i32, i32) {
    %c0_i32 = arith.constant 0 : i32
    %c0_i32_0 = arith.constant 0 : i32
    %c0_i32_1 = arith.constant 0 : i32
    return %arg0, %c0_i32, %c0_i32_0 : i32, i32, i32
  }
}

</mosaic_0001>

<llo_original>
// kernel: tpu_custom_call.1
$region0: #{tpu_custom_call.1}
  #allocation0 [shape = 'u32[]', space=smem, size = 0x4, offset = 0x4, fixed_abs, tag = 'smem constant byte address 0x4 - core index']
  #allocation1 [shape = 'u32[72,128]{1,0:T(1,128)}', space=vmem, size = 0x9000, scoped, tag = 'internal scratch']
  %s0 = inlined_call_operand.vmem [shape: f32[2,256,16], index: 0, kind: input, shape index: {}]
  %s1 = inlined_call_operand.vmem [shape: f32[2,256,8], index: 1, kind: input, shape index: {}]
  %s2 = inlined_call_operand.vmem [shape: f32[2,256,8], index: 2, kind: input, shape index: {}]
  %s3 = inlined_call_operand.hbm [shape: f32[2,1,16], index: 3, kind: output, shape index: {0}]
  %s4 = inlined_call_operand.hbm [shape: f32[2,1,8], index: 4, kind: output, shape index: {1}]
  %s5 = inlined_call_operand.hbm [shape: f32[2,1,8], index: 5, kind: output, shape index: {2}]
  %6 = xla_tuple %s3, %s4, %s5
  %s7 = sld [smem:[#allocation0]]
  $region65: #{tpu_custom_call.1} parent=0
    _
  %s9 = ssub.s32 1, %s7
  %s10 = scalar_select 0, %s9, %s7
  $region1: #{tpu_custom_call.1} parent=0
    #allocation2 [shape = 'u8[1024]{0}', space=vmem, size = 0x400, scoped, tag = 'output window, operand 0']
    #allocation3 [shape = 's32[2]{0}', space=sflag, size = 0x8, scoped, tag = 'scoped memory for tpu_custom_call.1']
    #allocation4 [shape = 'u8[1024]{0}', space=vmem, size = 0x400, scoped, tag = 'output window, operand 1']
    #allocation5 [shape = 's32[2]{0}', space=sflag, size = 0x8, scoped, tag = 'scoped memory for tpu_custom_call.1']
    #allocation6 [shape = 'u8[1024]{0}', space=vmem, size = 0x400, scoped, tag = 'output window, operand 2']
    %11 = vsyncpa [#allocation3], 0
    %s12 = scalar_lea.sflag [#allocation3], 1
    %13 = vsyncpa %s12, 0
    %14 = vsyncpa [#allocation5], 0
    %s15 = scalar_lea.sflag [#allocation5], 1
    %16 = vsyncpa %s15, 0
    loop: start=0, step=1, limit=10
    $region2: #{tpu_custom_call.1} parent=1 // loop_pre_header
      _
    $region3: #{tpu_custom_call.1} parent=1 // loop_header
      %s18 = sphi 0, %s22
      %p19 = scmp.ge.s32.totalorder %s18, 10
      %s25 = sphi 0, %s37
      %s26 = sphi 0, %s33
      %s27 = sphi 0, %s25
      %s28 = sphi 0, %s26
      %s29 = sphi 0, %s27
      %s30 = sphi 0, %s28
      %s42 = sphi 0, %s44
      %s45 = sphi 0, %s42
      %s46 = sphi 0, %s45
      %s62 = sphi 0, %s46
      %s70 = sphi 0, %s72
      %s73 = sphi 0, %s70
      %s74 = sphi 0, %s73
      %s90 = sphi 0, %s74
      %s98 = sphi 0, %s100
      %s101 = sphi 0, %s98
      %s102 = sphi 0, %s101
      %s118 = sphi 0, %s102
      %s124 = sphi 0, %s126
      %s127 = sphi 0, %s124
      %s128 = sphi 0, %s127
      %s144 = sphi 0, %s128
      %s150 = sphi 0, %s152
      %s153 = sphi 0, %s150
      %s154 = sphi 0, %s153
      %s170 = sphi 0, %s154
      %s176 = sphi 0, %s178
      %s179 = sphi 0, %s176
      %s180 = sphi 0, %s179
      %s196 = sphi 0, %s180
    $region4: #{tpu_custom_call.1} parent=1 // loop_header_branch
      %21 = sbr.rel (%p19) target = $region8
    $region5: #{tpu_custom_call.1} parent=1 // loop_body
      %s23 = ssub.s32 %s18, 1
      %s24 = ssub.s32 %s18, 2
      %s31 = sadd.s32 1, %s26
      %p32 = scmp.ge.s32.totalorder %s31, 4
      %s33 = scalar_select %p32, 0, %s31
      %s34 = sadd.s32 1, %s25
      %s35 = scalar_select %p32, %s34, %s25
      %p36 = scmp.ge.s32.totalorder %s35, 2
      %s37 = scalar_select %p36, 0, %s35
      %s38 = ssub.s32 %s25, %s37
      %s39 = ssub.s32 %s26, %s33
      %s40 = sor.u32 %s38, %s39
      %p41 = scmp.eq.s32.totalorder %s40, 0
      %s43 = sadd.s32 %s42, 1
      %s44 = scalar_select %p41, %s42, %s43
      %p47 = pneg %p41
      %p48 = scmp.eq.s32.totalorder %s18, 7
      %p49 = por %p47, %p48
      %p50 = scmp.ne.s32.totalorder %s42, %s45
      %p51 = scmp.eq.s32.totalorder %s18, 0
      %p52 = por %p50, %p51
      %p53 = scmp.ne.s32.totalorder %s42, %s45
      %p54 = scmp.eq.s32.totalorder %s23, 7
      %p55 = por %p53, %p54
      %p56 = scmp.ne.s32.totalorder %s45, %s46
      %p57 = scmp.eq.s32.totalorder %s23, 0
      %p58 = por %p56, %p57
      %p59 = scmp.ne.s32.totalorder %s45, %s46
      %p60 = scmp.eq.s32.totalorder %s24, 7
      %p61 = por %p59, %p60
      %p63 = scmp.ne.s32.totalorder %s46, %s62
      %p64 = scmp.eq.s32.totalorder %s24, 0
      %p65 = por %p63, %p64
      %s66 = ssub.s32 %s25, %s37
      %s67 = ssub.s32 %s26, %s33
      %s68 = sor.u32 %s66, %s67
      %p69 = scmp.eq.s32.totalorder %s68, 0
      %s71 = sadd.s32 %s70, 1
      %s72 = scalar_select %p69, %s70, %s71
      %p75 = pneg %p69
      %p76 = scmp.eq.s32.totalorder %s18, 7
      %p77 = por %p75, %p76
      %p78 = scmp.ne.s32.totalorder %s70, %s73
      %p79 = scmp.eq.s32.totalorder %s18, 0
      %p80 = por %p78, %p79
      %p81 = scmp.ne.s32.totalorder %s70, %s73
      %p82 = scmp.eq.s32.totalorder %s23, 7
      %p83 = por %p81, %p82
      %p84 = scmp.ne.s32.totalorder %s73, %s74
      %p85 = scmp.eq.s32.totalorder %s23, 0
      %p86 = por %p84, %p85
      %p87 = scmp.ne.s32.totalorder %s73, %s74
      %p88 = scmp.eq.s32.totalorder %s24, 7
      %p89 = por %p87, %p88
      %p91 = scmp.ne.s32.totalorder %s74, %s90
      %p92 = scmp.eq.s32.totalorder %s24, 0
      %p93 = por %p91, %p92
      %s94 = ssub.s32 %s25, %s37
      %s95 = ssub.s32 %s26, %s33
      %s96 = sor.u32 %s94, %s95
      %p97 = scmp.eq.s32.totalorder %s96, 0
      %s99 = sadd.s32 %s98, 1
      %s100 = scalar_select %p97, %s98, %s99
      %p103 = pneg %p97
      %p104 = scmp.eq.s32.totalorder %s18, 7
      %p105 = por %p103, %p104
      %p106 = scmp.ne.s32.totalorder %s98, %s101
      %p107 = scmp.eq.s32.totalorder %s18, 0
      %p108 = por %p106, %p107
      %p109 = scmp.ne.s32.totalorder %s98, %s101
      %p110 = scmp.eq.s32.totalorder %s23, 7
      %p111 = por %p109, %p110
      %p112 = scmp.ne.s32.totalorder %s101, %s102
      %p113 = scmp.eq.s32.totalorder %s23, 0
      %p114 = por %p112, %p113
      %p115 = scmp.ne.s32.totalorder %s101, %s102
      %p116 = scmp.eq.s32.totalorder %s24, 7
      %p117 = por %p115, %p116
      %p119 = scmp.ne.s32.totalorder %s102, %s118
      %p120 = scmp.eq.s32.totalorder %s24, 0
      %p121 = por %p119, %p120
      %s122 = ssub.s32 %s25, %s37
      %p123 = scmp.eq.s32.totalorder %s122, 0
      %s125 = sadd.s32 %s124, 1
      %s126 = scalar_select %p123, %s124, %s125
      %p129 = pneg %p123
      %p130 = scmp.eq.s32.totalorder %s18, 7
      %p131 = por %p129, %p130
      %p132 = scmp.ne.s32.totalorder %s124, %s127
      %p133 = scmp.eq.s32.totalorder %s18, 0
      %p134 = por %p132, %p133
      %p135 = scmp.ne.s32.totalorder %s124, %s127
      %p136 = scmp.eq.s32.totalorder %s23, 7
      %p137 = por %p135, %p136
      %p138 = scmp.ne.s32.totalorder %s127, %s128
      %p139 = scmp.eq.s32.totalorder %s23, 0
      %p140 = por %p138, %p139
      %p141 = scmp.ne.s32.totalorder %s127, %s128
      %p142 = scmp.eq.s32.totalorder %s24, 7
      %p143 = por %p141, %p142
      %p145 = scmp.ne.s32.totalorder %s128, %s144
      %p146 = scmp.eq.s32.totalorder %s24, 0
      %p147 = por %p145, %p146
      %s148 = ssub.s32 %s25, %s37
      %p149 = scmp.eq.s32.totalorder %s148, 0
      %s151 = sadd.s32 %s150, 1
      %s152 = scalar_select %p149, %s150, %s151
      %p155 = pneg %p149
      %p156 = scmp.eq.s32.totalorder %s18, 7
      %p157 = por %p155, %p156
      %p158 = scmp.ne.s32.totalorder %s150, %s153
      %p159 = scmp.eq.s32.totalorder %s18, 0
      %p160 = por %p158, %p159
      %p161 = scmp.ne.s32.totalorder %s150, %s153
      %p162 = scmp.eq.s32.totalorder %s23, 7
      %p163 = por %p161, %p162
      %p164 = scmp.ne.s32.totalorder %s153, %s154
      %p165 = scmp.eq.s32.totalorder %s23, 0
      %p166 = por %p164, %p165
      %p167 = scmp.ne.s32.totalorder %s153, %s154
      %p168 = scmp.eq.s32.totalorder %s24, 7
      %p169 = por %p167, %p168
      %p171 = scmp.ne.s32.totalorder %s154, %s170
      %p172 = scmp.eq.s32.totalorder %s24, 0
      %p173 = por %p171, %p172
      %s174 = ssub.s32 %s25, %s37
      %p175 = scmp.eq.s32.totalorder %s174, 0
      %s177 = sadd.s32 %s176, 1
      %s178 = scalar_select %p175, %s176, %s177
      %p181 = pneg %p175
      %p182 = scmp.eq.s32.totalorder %s18, 7
      %p183 = por %p181, %p182
      %p184 = scmp.ne.s32.totalorder %s176, %s179
      %p185 = scmp.eq.s32.totalorder %s18, 0
      %p186 = por %p184, %p185
      %p187 = scmp.ne.s32.totalorder %s176, %s179
      %p188 = scmp.eq.s32.totalorder %s23, 7
      %p189 = por %p187, %p188
      %p190 = scmp.ne.s32.totalorder %s179, %s180
      %p191 = scmp.eq.s32.totalorder %s23, 0
      %p192 = por %p190, %p191
      %p193 = scmp.ne.s32.totalorder %s179, %s180
      %p194 = scmp.eq.s32.totalorder %s24, 7
      %p195 = por %p193, %p194
      %p197 = scmp.ne.s32.totalorder %s180, %s196
      %p198 = scmp.eq.s32.totalorder %s24, 0
      %p199 = por %p197, %p198
      %p200 = scmp.le.s32.totalorder 1, %s18
      %p201 = scmp.lt.s32.totalorder %s18, 9
      %p202 = pnand %p200, %p201
      %p203 = pneg %p202
      // Predicated region
      $region9: #{tpu_custom_call.1} parent=5 // pred_check
        _
      $region10: #{tpu_custom_call.1} parent=5 // pred_check_branch
        %205 = sbr.rel (%p202) target = $region12
      $region11: #{tpu_custom_call.1} parent=5 // pred_region
        %s206 = ssub.s32 %s18, 1
      $region12: #{tpu_custom_call.1} parent=5 // pred_fallthru
        _
      %p207 = scmp.lt.s32.totalorder %s18, 8
      // Predicated region
      $region13: #{tpu_custom_call.1} parent=5 // pred_check
        %p208 = pneg %p207
      $region14: #{tpu_custom_call.1} parent=5 // pred_check_branch
        %210 = sbr.rel (%p208) target = $region16
      $region15: #{tpu_custom_call.1} parent=5 // pred_region
        // Predicated region
        $region17: #{tpu_custom_call.1} parent=15 // pred_check
          %p211 = pneg %p52
        $region18: #{tpu_custom_call.1} parent=15 // pred_check_branch
          %213 = sbr.rel (%p211) target = $region20
        $region19: #{tpu_custom_call.1} parent=15 // pred_region
          %s214 = smul.u32 8, %s26
          %p215 = scmp.lt.s32.totalorder %s25, 1
          %s216 = scalar_select %p215, %s25, 1
          %p217 = scmp.lt.s32.totalorder %s214, 31
          %s218 = scalar_select %p217, %s214, 31
          %s219 = smul.addr %s216, 32
          %s220 = sadd.s32 %s218, %s219
          %s221 = smul.addr %s220, 8
          %s222 = scalar_lea.vmem %s0, %s221
          %s223 = smul.u32 8, %s26
        $region20: #{tpu_custom_call.1} parent=15 // pred_fallthru
          _
        // Predicated region
        $region21: #{tpu_custom_call.1} parent=15 // pred_check
          %p224 = pneg %p80
        $region22: #{tpu_custom_call.1} parent=15 // pred_check_branch
          %226 = sbr.rel (%p224) target = $region24
        $region23: #{tpu_custom_call.1} parent=15 // pred_region
          %s227 = smul.u32 8, %s26
          %p228 = scmp.lt.s32.totalorder %s25, 1
          %s229 = scalar_select %p228, %s25, 1
          %p230 = scmp.lt.s32.totalorder %s227, 31
          %s231 = scalar_select %p230, %s227, 31
          %s232 = smul.addr %s229, 32
          %s233 = sadd.s32 %s231, %s232
          %s234 = smul.addr %s233, 8
          %s235 = scalar_lea.vmem %s1, %s234
          %s236 = smul.u32 8, %s26
        $region24: #{tpu_custom_call.1} parent=15 // pred_fallthru
          _
        // Predicated region
        $region25: #{tpu_custom_call.1} parent=15 // pred_check
          %p237 = pneg %p108
        $region26: #{tpu_custom_call.1} parent=15 // pred_check_branch
          %239 = sbr.rel (%p237) target = $region28
        $region27: #{tpu_custom_call.1} parent=15 // pred_region
          %s240 = smul.u32 8, %s26
          %p241 = scmp.lt.s32.totalorder %s25, 1
          %s242 = scalar_select %p241, %s25, 1
          %p243 = scmp.lt.s32.totalorder %s240, 31
          %s244 = scalar_select %p243, %s240, 31
          %s245 = smul.addr %s242, 32
          %s246 = sadd.s32 %s244, %s245
          %s247 = smul.addr %s246, 8
          %s248 = scalar_lea.vmem %s2, %s247
          %s249 = smul.u32 8, %s26
        $region28: #{tpu_custom_call.1} parent=15 // pred_fallthru
          _
      $region16: #{tpu_custom_call.1} parent=5 // pred_fallthru
        _
      %p250 = scmp.le.s32.totalorder 1, %s18
      %p251 = scmp.lt.s32.totalorder %s18, 9
      %p252 = pnand %p250, %p251
      %p253 = pneg %p252
      // Predicated region
      $region29: #{tpu_custom_call.1} parent=5 // pred_check
        _
      $region30: #{tpu_custom_call.1} parent=5 // pred_check_branch
        %255 = sbr.rel (%p252) target = $region32
      $region31: #{tpu_custom_call.1} parent=5 // pred_region
        %s256 = ssub.s32 %s18, 1
        %s257 = smul.u32 8, %s28
        %p258 = scmp.lt.s32.totalorder %s27, 1
        %s259 = scalar_select %p258, %s27, 1
        %p260 = scmp.lt.s32.totalorder %s257, 31
        %s261 = scalar_select %p260, %s257, 31
        %s262 = smul.addr %s259, 32
        %s263 = sadd.s32 %s261, %s262
        %s264 = smul.addr %s263, 8
        %s265 = scalar_lea.vmem %s0, %s264
        %p266 = pneg %p58
        %p267 = pneg %p55
        %s268 = smul.u32 8, %s28
        %p269 = scmp.lt.s32.totalorder %s27, 1
        %s270 = scalar_select %p269, %s27, 1
        %p271 = scmp.lt.s32.totalorder %s268, 31
        %s272 = scalar_select %p271, %s268, 31
        %s273 = smul.addr %s270, 32
        %s274 = sadd.s32 %s272, %s273
        %s275 = smul.addr %s274, 8
        %s276 = scalar_lea.vmem %s1, %s275
        %p277 = pneg %p86
        %p278 = pneg %p83
        %s279 = smul.u32 8, %s28
        %p280 = scmp.lt.s32.totalorder %s27, 1
        %s281 = scalar_select %p280, %s27, 1
        %p282 = scmp.lt.s32.totalorder %s279, 31
        %s283 = scalar_select %p282, %s279, 31
        %s284 = smul.addr %s281, 32
        %s285 = sadd.s32 %s283, %s284
        %s286 = smul.addr %s285, 8
        %s287 = scalar_lea.vmem %s2, %s286
        %p288 = pneg %p114
        %p289 = pneg %p111
        %p290 = pneg %p140
        %p291 = pneg %p137
        %s292 = sand.u32 %s127, 1
        %s293 = scalar_lea.sflag [#allocation3], %s292
        %s294 = sand.u32 %s127, 1
        %s295 = scalar_lea.vmem [#allocation2], %s294
        %p296 = pneg %p166
        %p297 = pneg %p163
        %s298 = sand.u32 %s23, 1
        %s299 = scalar_lea.sflag [#allocation5], %s298
        %s300 = sand.u32 %s153, 1
        %s301 = scalar_lea.vmem [#allocation4], %s300
        %p302 = pneg %p192
        %p303 = pneg %p189
        %s304 = sand.u32 %s23, 1
        %s305 = scalar_lea.sflag [#allocation5], %s304
        %s306 = sand.u32 %s179, 1
        %s307 = scalar_lea.vmem [#allocation6], %s306
        %s308 = smul.u32 8, %s28
        %p309 = scmp.lt.s32.totalorder %s27, 1
        %s310 = scalar_select %p309, %s27, 1
        %p311 = scmp.lt.s32.totalorder %s308, 31
        %s312 = scalar_select %p311, %s308, 31
        %s313 = smul.addr %s310, 32
        %s314 = sadd.s32 %s312, %s313
        %s315 = smul.addr %s314, 8
        %s316 = scalar_lea.vmem %s0, %s315
        %s317 = smul.u32 8, %s28
        %s318 = smul.u32 8, %s28
        %p319 = scmp.lt.s32.totalorder %s27, 1
        %s320 = scalar_select %p319, %s27, 1
        %p321 = scmp.lt.s32.totalorder %s318, 31
        %s322 = scalar_select %p321, %s318, 31
        %s323 = smul.addr %s320, 32
        %s324 = sadd.s32 %s322, %s323
        %s325 = smul.addr %s324, 8
        %s326 = scalar_lea.vmem %s1, %s325
        %s327 = smul.u32 8, %s28
        %s328 = smul.u32 8, %s28
        %p329 = scmp.lt.s32.totalorder %s27, 1
        %s330 = scalar_select %p329, %s27, 1
        %p331 = scmp.lt.s32.totalorder %s328, 31
        %s332 = scalar_select %p331, %s328, 31
        %s333 = smul.addr %s330, 32
        %s334 = sadd.s32 %s332, %s333
        %s335 = smul.addr %s334, 8
        %s336 = scalar_lea.vmem %s2, %s335
        %s337 = smul.u32 8, %s28
        %p338 = scmp.eq.s32.totalorder %s28, 0
        // Predicated region
        $region33: #{tpu_custom_call.1} parent=31 // pred_check
          %p339 = pneg %p338
        $region34: #{tpu_custom_call.1} parent=31 // pred_check_branch
          %341 = sbr.rel (%p339) target = $region36
        $region35: #{tpu_custom_call.1} parent=31 // pred_region
          %vm342 = vcmask 122880
          %343 = vst.msk [vmem:[%s295] sm:$0x1] %vm342, 0.0
          %vm344 = vcmask 57344
          %345 = vst.msk [vmem:[%s301] sm:$0x1] %vm344, 0.0
          %346 = vst.msk [vmem:[%s307] sm:$0x1] %vm344, 0.0
        $region36: #{tpu_custom_call.1} parent=31 // pred_fallthru
          _
        %v347 = vld [vmem:[%s295] sm:$0x1]
        %v348 = vld [vmem:[%s316] sm:$0xff]
        %v349 = vld [vmem:[%s316 + $0x8] sm:$0xff]
        %v350 = vld [vmem:[%s316 + $0x10] sm:$0xff]
        %v351 = vld [vmem:[%s316 + $0x18] sm:$0xff]
        %v352 = vld [vmem:[%s316 + $0x20] sm:$0xff]
        %v353 = vld [vmem:[%s316 + $0x28] sm:$0xff]
        %v354 = vld [vmem:[%s316 + $0x30] sm:$0xff]
        %v355 = vld [vmem:[%s316 + $0x38] sm:$0xff]
        %vm356 = vcmask 130048
        %v357 = vsel %vm356, %v348, 0.0
        %v358 = vsel %vm356, %v349, 0.0
        %v359 = vadd.f32 %v357, %v358
        %v360 = vsel %vm356, %v350, 0.0
        %v361 = vadd.f32 %v359, %v360
        %v362 = vsel %vm356, %v351, 0.0
        %v363 = vadd.f32 %v361, %v362
        %v364 = vsel %vm356, %v352, 0.0
        %v365 = vadd.f32 %v363, %v364
        %v366 = vsel %vm356, %v353, 0.0
        %v367 = vadd.f32 %v365, %v366
        %v368 = vsel %vm356, %v354, 0.0
        %v369 = vadd.f32 %v367, %v368
        %v370 = vsel %vm356, %v355, 0.0
        %v371 = vadd.f32 %v369, %v370
        %v372 = vrot.slane %v371, 4
        %v373 = vadd.f32 %v371, %v372
        %v374 = vrot.slane %v373, 2
        %v375 = vadd.f32 %v373, %v374
        %v376 = vrot.slane %v375, 1
        %v377 = vadd.f32 %v375, %v376
        %v378 = vadd.f32 %v347, %v377
        %vm379 = vcmask 122880
        %380 = vst.msk [vmem:[%s295] sm:$0x1] %vm379, %v378
        %v381 = vld [vmem:[%s301] sm:$0x1]
        %v382 = vld [vmem:[%s326] sm:$0xff]
        %v383 = vld [vmem:[%s326 + $0x8] sm:$0xff]
        %v384 = vld [vmem:[%s326 + $0x10] sm:$0xff]
        %v385 = vld [vmem:[%s326 + $0x18] sm:$0xff]
        %v386 = vld [vmem:[%s326 + $0x20] sm:$0xff]
        %v387 = vld [vmem:[%s326 + $0x28] sm:$0xff]
        %v388 = vld [vmem:[%s326 + $0x30] sm:$0xff]
        %v389 = vld [vmem:[%s326 + $0x38] sm:$0xff]
        %vm390 = vcmask 64512
        %v391 = vsel %vm390, %v382, 0.0
        %v392 = vsel %vm390, %v383, 0.0
        %v393 = vadd.f32 %v391, %v392
        %v394 = vsel %vm390, %v384, 0.0
        %v395 = vadd.f32 %v393, %v394
        %v396 = vsel %vm390, %v385, 0.0
        %v397 = vadd.f32 %v395, %v396
        %v398 = vsel %vm390, %v386, 0.0
        %v399 = vadd.f32 %v397, %v398
        %v400 = vsel %vm390, %v387, 0.0
        %v401 = vadd.f32 %v399, %v400
        %v402 = vsel %vm390, %v388, 0.0
        %v403 = vadd.f32 %v401, %v402
        %v404 = vsel %vm390, %v389, 0.0
        %v405 = vadd.f32 %v403, %v404
        %v406 = vrot.slane %v405, 4
        %v407 = vadd.f32 %v405, %v406
        %v408 = vrot.slane %v407, 2
        %v409 = vadd.f32 %v407, %v408
        %v410 = vrot.slane %v409, 1
        %v411 = vadd.f32 %v409, %v410
        %v412 = vadd.f32 %v381, %v411
        %vm413 = vcmask 57344
        %414 = vst.msk [vmem:[%s301] sm:$0x1] %vm413, %v412
        %v415 = vld [vmem:[%s307] sm:$0x1]
        %v416 = vld [vmem:[%s336] sm:$0xff]
        %v417 = vld [vmem:[%s336 + $0x8] sm:$0xff]
        %v418 = vld [vmem:[%s336 + $0x10] sm:$0xff]
        %v419 = vld [vmem:[%s336 + $0x18] sm:$0xff]
        %v420 = vld [vmem:[%s336 + $0x20] sm:$0xff]
        %v421 = vld [vmem:[%s336 + $0x28] sm:$0xff]
        %v422 = vld [vmem:[%s336 + $0x30] sm:$0xff]
        %v423 = vld [vmem:[%s336 + $0x38] sm:$0xff]
        %v424 = vsel %vm390, %v416, 0.0
        %v425 = vsel %vm390, %v417, 0.0
        %v426 = vadd.f32 %v424, %v425
        %v427 = vsel %vm390, %v418, 0.0
        %v428 = vadd.f32 %v426, %v427
        %v429 = vsel %vm390, %v419, 0.0
        %v430 = vadd.f32 %v428, %v429
        %v431 = vsel %vm390, %v420, 0.0
        %v432 = vadd.f32 %v430, %v431
        %v433 = vsel %vm390, %v421, 0.0
        %v434 = vadd.f32 %v432, %v433
        %v435 = vsel %vm390, %v422, 0.0
        %v436 = vadd.f32 %v434, %v435
        %v437 = vsel %vm390, %v423, 0.0
        %v438 = vadd.f32 %v436, %v437
        %v439 = vrot.slane %v438, 4
        %v440 = vadd.f32 %v438, %v439
        %v441 = vrot.slane %v440, 2
        %v442 = vadd.f32 %v440, %v441
        %v443 = vrot.slane %v442, 1
        %v444 = vadd.f32 %v442, %v443
        %v445 = vadd.f32 %v415, %v444
        %446 = vst.msk [vmem:[%s307] sm:$0x1] %vm413, %v445
        %s447 = sand.u32 %s127, 1
        %s448 = scalar_lea.sflag [#allocation3], %s447
        %s449 = sand.u32 %s127, 1
        %s450 = scalar_lea.vmem [#allocation2], %s449
        %s451 = sand.u32 %s23, 1
        %s452 = scalar_lea.sflag [#allocation5], %s451
        %s453 = sand.u32 %s153, 1
        %s454 = scalar_lea.vmem [#allocation4], %s453
        %s455 = sand.u32 %s23, 1
        %s456 = scalar_lea.sflag [#allocation5], %s455
        %s457 = sand.u32 %s179, 1
        %s458 = scalar_lea.vmem [#allocation6], %s457
        // Predicated region
        $region37: #{tpu_custom_call.1} parent=31 // pred_check
          %p459 = pneg %p137
        $region38: #{tpu_custom_call.1} parent=31 // pred_check_branch
          %461 = sbr.rel (%p459) target = $region40
        $region39: #{tpu_custom_call.1} parent=31 // pred_region
          %463 = vsyncadd %s448, 0
          %s464 = scalar_lea.hbm %s3, %s27
          %s466 = sshll.u32 %s450, 4
          %s467 = int_to_ptr.vmem [resolvable:$true] %s466
          %s468 = sshll.u32 %s464, 4
          %s469 = int_to_ptr.hbm [resolvable:$true] %s468
          %471 = dma.vmem_to_hbm [thread:$0]  %s467, 16, %s469, %s448
        $region40: #{tpu_custom_call.1} parent=31 // pred_fallthru
          _
        // Predicated region
        $region41: #{tpu_custom_call.1} parent=31 // pred_check
          %p472 = pneg %p163
        $region42: #{tpu_custom_call.1} parent=31 // pred_check_branch
          %474 = sbr.rel (%p472) target = $region44
        $region43: #{tpu_custom_call.1} parent=31 // pred_region
          %476 = vsyncadd %s452, 0
          %s477 = scalar_lea.hbm %s4, %s27
          %s479 = sshll.u32 %s454, 4
          %s480 = int_to_ptr.vmem [resolvable:$true] %s479
          %s481 = sshll.u32 %s477, 4
          %s482 = int_to_ptr.hbm [resolvable:$true] %s481
          %484 = dma.vmem_to_hbm [thread:$0]  %s480, 16, %s482, %s452
        $region44: #{tpu_custom_call.1} parent=31 // pred_fallthru
          _
        // Predicated region
        $region45: #{tpu_custom_call.1} parent=31 // pred_check
          %p485 = pneg %p189
        $region46: #{tpu_custom_call.1} parent=31 // pred_check_branch
          %487 = sbr.rel (%p485) target = $region48
        $region47: #{tpu_custom_call.1} parent=31 // pred_region
          %489 = vsyncadd %s456, 0
          %s490 = scalar_lea.hbm %s5, %s27
          %s492 = sshll.u32 %s458, 4
          %s493 = int_to_ptr.vmem [resolvable:$true] %s492
          %s494 = sshll.u32 %s490, 4
          %s495 = int_to_ptr.hbm [resolvable:$true] %s494
          %497 = dma.vmem_to_hbm [thread:$0]  %s493, 16, %s495, %s456
        $region48: #{tpu_custom_call.1} parent=31 // pred_fallthru
          _
      $region32: #{tpu_custom_call.1} parent=5 // pred_fallthru
        _
      %p498 = scmp.le.s32.totalorder 2, %s18
      // Predicated region
      $region49: #{tpu_custom_call.1} parent=5 // pred_check
        %p499 = pneg %p498
      $region50: #{tpu_custom_call.1} parent=5 // pred_check_branch
        %501 = sbr.rel (%p499) target = $region52
      $region51: #{tpu_custom_call.1} parent=5 // pred_region
        %s502 = ssub.s32 %s18, 2
        // Predicated region
        $region53: #{tpu_custom_call.1} parent=51 // pred_check
          %p503 = pneg %p143
        $region54: #{tpu_custom_call.1} parent=51 // pred_check_branch
          %505 = sbr.rel (%p503) target = $region56
        $region55: #{tpu_custom_call.1} parent=51 // pred_region
          %s506 = sand.u32 %s128, 1
          %s507 = scalar_lea.sflag [#allocation3], %s506
          %s508 = sand.u32 %s128, 1
          %s509 = scalar_lea.vmem [#allocation2], %s508
          %511 = dma.done %s507, 16
        $region56: #{tpu_custom_call.1} parent=51 // pred_fallthru
          _
        // Predicated region
        $region57: #{tpu_custom_call.1} parent=51 // pred_check
          %p512 = pneg %p169
        $region58: #{tpu_custom_call.1} parent=51 // pred_check_branch
          %514 = sbr.rel (%p512) target = $region60
        $region59: #{tpu_custom_call.1} parent=51 // pred_region
          %s515 = sand.u32 %s24, 1
          %s516 = scalar_lea.sflag [#allocation5], %s515
          %s517 = sand.u32 %s154, 1
          %s518 = scalar_lea.vmem [#allocation4], %s517
          %520 = dma.done %s516, 16
        $region60: #{tpu_custom_call.1} parent=51 // pred_fallthru
          _
        // Predicated region
        $region61: #{tpu_custom_call.1} parent=51 // pred_check
          %p521 = pneg %p195
        $region62: #{tpu_custom_call.1} parent=51 // pred_check_branch
          %523 = sbr.rel (%p521) target = $region64
        $region63: #{tpu_custom_call.1} parent=51 // pred_region
          %s524 = sand.u32 %s24, 1
          %s525 = scalar_lea.sflag [#allocation5], %s524
          %s526 = sand.u32 %s180, 1
          %s527 = scalar_lea.vmem [#allocation6], %s526
          %529 = dma.done %s525, 16
        $region64: #{tpu_custom_call.1} parent=51 // pred_fallthru
          _
      $region52: #{tpu_custom_call.1} parent=5 // pred_fallthru
        _
    $region6: #{tpu_custom_call.1} parent=1 // loop_footer
      %s22 = sadd.s32 1, %s18
    $region7: #{tpu_custom_call.1} parent=1 // loop_footer_branch
      %17 = sbr.rel target = $region3
    $region8: #{tpu_custom_call.1} parent=1 // loop_exit
      _
    %530 = vsyncpa [#allocation3], 1
    %s531 = scalar_lea.sflag [#allocation3], 1
    %532 = vsyncpa %s531, 1
    %533 = vsyncpa [#allocation5], 1
    %s534 = scalar_lea.sflag [#allocation5], 1
    %535 = vsyncpa %s534, 1

</llo_original>
